<compile_context>
chip_gen: v7x
topology: tpu7x:2x2x1
jax: 0.10.0
libtpu: 0.0.40
codegen_flags: <defaults>
</compile_context>

<pallas_src>
import functools

import jax
import jax.numpy as jnp
from jax.experimental import pallas as pl
from jax.experimental.pallas import tpu as pltpu

LANE = 128
TARGET_TILE_BYTES = 4 * 1024 * 1024      # ~4 MiB per tile (2x in + 2x out = 16 MiB)
SMALL_BYTES = 512 * 1024                 # below this a single block is fine
MIN_STEPS = 8                            # aim for >= this many grid steps
PARAMS_RESIDENT_MAX_ROWS = 2048          # resident params stay under ~4 MiB VMEM
VMEM_LIMIT_BYTES = 32 * 1024 * 1024      # safe on v5e/v6e/v7x


def _round_up(a, b):
    return -(-a // b) * b


def _normalize_kernel_resident(mean_ref, scale_ref, x_ref, o_ref, *,
                               block_rows, single_row_block):
    """mean_ref / scale_ref: (Rp, 1) resident in VMEM for the whole grid."""
    if single_row_block:
        mean = mean_ref[...]
        scale = scale_ref[...]
    else:
        # block_rows is a multiple of 8 whenever there is >1 row block.
        r0 = pl.multiple_of(pl.program_id(0) * block_rows, 8)
        mean = mean_ref[pl.ds(r0, block_rows), :]
        scale = scale_ref[pl.ds(r0, block_rows), :]
    o_ref[...] = ((x_ref[...] - mean) * scale).astype(o_ref.dtype)


def _normalize_kernel_blocked(mean_ref, scale_ref, x_ref, o_ref):
    """Fallback: params delivered as a (br, 1) block per row step."""
    o_ref[...] = ((x_ref[...] - mean_ref[...]) * scale_ref[...]).astype(o_ref.dtype)


def _choose_blocks(R, L, itemsize):
    """Pick (block_rows, block_lanes) for the (R, L) lane-dense view."""
    sublane = max(8, 32 // itemsize)             # 8 f32, 16 bf16, 32 int8/fp8
    total_bytes = R * L * itemsize
    row_bytes = _round_up(L, LANE) * itemsize    # VMEM bytes of one full-width row

    if total_bytes <= SMALL_BYTES:
        # Tiny input: one block covering everything (full dims -> always legal).
        return R, L

    if R >= 2 * sublane and sublane * row_bytes <= TARGET_TILE_BYTES:
        # Full-width rows; chunk the row dimension (multiples of sublane).
        br_bytes_cap = TARGET_TILE_BYTES // row_bytes        # >= sublane by branch cond
        br_steps_cap = max(1, R // MIN_STEPS)                 # try to get >= MIN_STEPS
        br = max(sublane, (min(br_bytes_cap, br_steps_cap) // sublane) * sublane)
        return br, L

    # Few (or very long) rows: chunk the lane dimension (multiples of 128).
    br = R if R < 2 * sublane else sublane
    br_pad = _round_up(br, sublane)
    bl_bytes_cap = TARGET_TILE_BYTES // (br_pad * itemsize)
    bl_steps_cap = max(1, L // MIN_STEPS)
    bl = max(LANE, (min(bl_bytes_cap, bl_steps_cap) // LANE) * LANE)
    if bl >= L:
        bl = L
    return br, bl


def normalize(x, mean, std):
    """x: (N, C, H, W); mean, std: (C,) — returns (x - mean[c]) / std[c]."""
    N, C, H, W = x.shape
    assert mean.shape == (C,) and std.shape == (C,)

    R = N * C                  # rows: one per (image, channel)
    L = H * W                  # lanes: flattened spatial plane
    itemsize = x.dtype.itemsize

    # Lane-dense 2D view of the contiguous NCHW tensor (free reshape).
    x2 = x.reshape(R, L)

    br, bl = _choose_blocks(R, L, itemsize)
    grid_r = pl.cdiv(R, br)
    grid_l = pl.cdiv(L, bl)
    Rp = grid_r * br           # only the tiny per-row param vectors get padded

    # Per-row mean / reciprocal-std (channel of row r is r % C).
    mean_rows = jnp.tile(mean.astype(jnp.float32), N)
    scale_rows = jnp.tile(1.0 / std.astype(jnp.float32), N)
    if Rp != R:
        mean_rows = jnp.pad(mean_rows, (0, Rp - R))
        scale_rows = jnp.pad(scale_rows, (0, Rp - R), constant_values=1.0)
    mean_rows = mean_rows.reshape(Rp, 1)
    scale_rows = scale_rows.reshape(Rp, 1)

    if Rp <= PARAMS_RESIDENT_MAX_ROWS:
        # Whole param vectors live in VMEM for the whole grid (no per-step DMA).
        kernel = functools.partial(
            _normalize_kernel_resident,
            block_rows=br,
            single_row_block=(grid_r == 1),
        )
        param_spec = pl.BlockSpec((Rp, 1), lambda i, j: (0, 0))
    else:
        # Huge row count: fall back to per-block param slivers.
        kernel = _normalize_kernel_blocked
        param_spec = pl.BlockSpec((br, 1), lambda i, j: (i, 0))

    out2 = pl.pallas_call(
        kernel,
        out_shape=jax.ShapeDtypeStruct((R, L), x.dtype),
        grid=(grid_r, grid_l),
        in_specs=[
            param_spec,                                    # per-row mean
            param_spec,                                    # per-row 1/std
            pl.BlockSpec((br, bl), lambda i, j: (i, j)),   # x tile
        ],
        out_specs=pl.BlockSpec((br, bl), lambda i, j: (i, j)),
        compiler_params=pltpu.CompilerParams(
            # Pure elementwise map: both axes parallel (v7x dual-TC sharding).
            dimension_semantics=("parallel", "parallel"),
            vmem_limit_bytes=VMEM_LIMIT_BYTES,
        ),
    )(mean_rows, scale_rows, x2)

    return out2.reshape(N, C, H, W)


if __name__ == "__main__":
    # Deterministic parameters straight from the module's __init__.
    mean = jnp.array([0.485, 0.456, 0.406], dtype=jnp.float32)
    std = jnp.array([0.229, 0.224, 0.225], dtype=jnp.float32)

    def ref_normalize(x):
        # Mirrors PyTorch broadcasting of the (3,1,1) parameters.
        return (x - mean.reshape(1, 3, 1, 1)) / std.reshape(1, 3, 1, 1)

    key = jax.random.PRNGKey(0)
    k1, k2 = jax.random.split(key)

    # 1) Small single-block case.
    x_small = jax.random.uniform(k1, (2, 3, 16, 16), dtype=jnp.float32)
    out_small = jax.block_until_ready(normalize(x_small, mean, std))
    assert out_small.shape == x_small.shape and out_small.dtype == x_small.dtype
    assert jnp.allclose(out_small, ref_normalize(x_small), atol=1e-5, rtol=1e-5)

    # 2) Multi-block case with a ragged row edge (R = 18, br = 8, no x padding).
    x_big = jax.random.uniform(k2, (6, 3, 224, 224), dtype=jnp.float32)
    out_big = jax.block_until_ready(normalize(x_big, mean, std))
    assert out_big.shape == x_big.shape and out_big.dtype == x_big.dtype
    assert jnp.allclose(out_big, ref_normalize(x_big), atol=1e-5, rtol=1e-5)

    print("KERNEL_OK")
</pallas_src>

<mosaic_0001>
module attributes {stable_mosaic.version = 11 : i64} {
  func.func @_normalize_kernel_resident(%arg0: i32, %arg1: i32, %arg2: memref<6x1xf32, #tpu.memory_space<vmem>>, %arg3: memref<6x1xf32, #tpu.memory_space<vmem>>, %arg4: memref<6x256xf32, #tpu.memory_space<vmem>>, %arg5: memref<6x256xf32, #tpu.memory_space<vmem>>) attributes {dimension_semantics = [#tpu.dimension_semantics<parallel>, #tpu.dimension_semantics<parallel>], iteration_bounds = array<i64: 1, 1>, scalar_prefetch = 0 : i64, scratch_operands = 0 : i64, tpu.core_type = #tpu.core_type<tc>, window_params = [{pipeline_mode = #tpu.pipeline_mode<synchronous>, transform_indices = @transform_0, window_bounds = array<i64: 6, 1>}, {pipeline_mode = #tpu.pipeline_mode<synchronous>, transform_indices = @transform_1, window_bounds = array<i64: 6, 1>}, {transform_indices = @transform_2, window_bounds = array<i64: 6, 256>}, {transform_indices = @transform_3, window_bounds = array<i64: 6, 256>}]} {
    %c0 = arith.constant 0 : index
    %c0_0 = arith.constant 0 : index
    %0 = vector.load %arg2[%c0, %c0_0] : memref<6x1xf32, #tpu.memory_space<vmem>>, vector<6x1xf32>
    %c0_1 = arith.constant 0 : index
    %c0_2 = arith.constant 0 : index
    %1 = vector.load %arg3[%c0_1, %c0_2] : memref<6x1xf32, #tpu.memory_space<vmem>>, vector<6x1xf32>
    %c0_3 = arith.constant 0 : index
    %c0_4 = arith.constant 0 : index
    %2 = vector.load %arg4[%c0_3, %c0_4] : memref<6x256xf32, #tpu.memory_space<vmem>>, vector<6x256xf32>
    %3 = vector.broadcast %0 : vector<6x1xf32> to vector<6x256xf32>
    %4 = arith.subf %2, %3 : vector<6x256xf32>
    %5 = vector.broadcast %1 : vector<6x1xf32> to vector<6x256xf32>
    %6 = arith.mulf %4, %5 : vector<6x256xf32>
    %c0_5 = arith.constant 0 : index
    %c0_6 = arith.constant 0 : index
    %7 = vector.load %arg5[%c0_5, %c0_6] : memref<6x256xf32, #tpu.memory_space<vmem>>, vector<6x256xf32>
    tpu.vector_store %arg5[%c0_5, %c0_6], %6 {strides = array<i32>} : memref<6x256xf32, #tpu.memory_space<vmem>>, vector<6x256xf32>,
    return
  }
  func.func @transform_0(%arg0: i32, %arg1: i32) -> (i32, i32) {
    %c0_i32 = arith.constant 0 : i32
    %c0_i32_0 = arith.constant 0 : i32
    %c0_i32_1 = arith.constant 0 : i32
    return %c0_i32, %c0_i32_0 : i32, i32
  }
  func.func @transform_1(%arg0: i32, %arg1: i32) -> (i32, i32) {
    %c0_i32 = arith.constant 0 : i32
    %c0_i32_0 = arith.constant 0 : i32
    %c0_i32_1 = arith.constant 0 : i32
    return %c0_i32, %c0_i32_0 : i32, i32
  }
  func.func @transform_2(%arg0: i32, %arg1: i32) -> (i32, i32) {
    %c0_i32 = arith.constant 0 : i32
    return %arg0, %arg1 : i32, i32
  }
  func.func @transform_3(%arg0: i32, %arg1: i32) -> (i32, i32) {
    %c0_i32 = arith.constant 0 : i32
    return %arg0, %arg1 : i32, i32
  }
}

</mosaic_0001>

<llo_original>
// kernel: tpu_custom_call.1
$region0: #{tpu_custom_call.1}
  #allocation0 [shape = 'u32[]', space=smem, size = 0x4, offset = 0x4, fixed_abs, tag = 'smem constant byte address 0x4 - core index']
  #allocation1 [shape = 'u32[144,128]{1,0:T(1,128)}', space=vmem, size = 0x12000, scoped, tag = 'internal scratch']
  %s0 = inlined_call_operand.vmem [shape: f32[6,1], index: 0, kind: input, shape index: {}]
  %s1 = inlined_call_operand.vmem [shape: f32[6,1], index: 1, kind: input, shape index: {}]
  %s2 = inlined_call_operand.vmem [shape: f32[6,256], index: 2, kind: input, shape index: {}]
  %s3 = inlined_call_operand.hbm [shape: f32[6,256], index: 3, kind: output, shape index: {}]
  %s4 = sld [smem:[#allocation0]]
  $region22: #{tpu_custom_call.1} parent=0
    _
  %s6 = ssub.s32 1, %s4
  %s7 = scalar_select 0, %s6, %s4
  $region1: #{tpu_custom_call.1} parent=0
    #allocation2 [shape = 'u8[8192]{0}', space=vmem, size = 0x2000, scoped, tag = 'output window, operand 0, single buffered']
    #allocation3 [shape = 's32[1]{0}', space=sflag, size = 0x4, scoped, tag = 'scoped memory for tpu_custom_call.1']
    %8 = vsyncpa [#allocation3], 0
    // Predicated region
    $region2: #{tpu_custom_call.1} parent=1 // pred_check
      _
    $region3: #{tpu_custom_call.1} parent=1 // pred_check_branch
      %10 = sbr.rel (0) target = $region5
    $region4: #{tpu_custom_call.1} parent=1 // pred_region
      _
    $region5: #{tpu_custom_call.1} parent=1 // pred_fallthru
      _
    // Predicated region
    $region6: #{tpu_custom_call.1} parent=1 // pred_check
      _
    $region7: #{tpu_custom_call.1} parent=1 // pred_check_branch
      %12 = sbr.rel (0) target = $region9
    $region8: #{tpu_custom_call.1} parent=1 // pred_region
      _
    $region9: #{tpu_custom_call.1} parent=1 // pred_fallthru
      _
    // Predicated region
    $region10: #{tpu_custom_call.1} parent=1 // pred_check
      _
    $region11: #{tpu_custom_call.1} parent=1 // pred_check_branch
      %14 = sbr.rel (0) target = $region13
    $region12: #{tpu_custom_call.1} parent=1 // pred_region
      _
    $region13: #{tpu_custom_call.1} parent=1 // pred_fallthru
      _
    %v15 = vld [vmem:[%s0] sm:$0x3f]
    %v16 = vld [vmem:[%s1] sm:$0x3f]
    %v17 = vld [vmem:[%s2] sm:$0x3f]
    %v18 = vld [vmem:[%s2 + $0x8] sm:$0x3f]
    %20 = vset.pattern.permute.xlu0 0
    %21 = vperm.xlu0 %20, %v15
    %v22 = vpop.permute.xlu0 %21
    %v24 = vsub.f32 %v17, %v22
    %v25 = vsub.f32 %v18, %v22
    %27 = vset.pattern.permute.xlu0 0
    %28 = vperm.xlu0 %27, %v16
    %v29 = vpop.permute.xlu0 %28
    %v31 = vmul.f32 %v24, %v29
    %v32 = vmul.f32 %v25, %v29
    %33 = vst [vmem:[#allocation2] sm:$0x3f] %v31
    %34 = vst [vmem:[#allocation2 + $0x8] sm:$0x3f] %v32
    // Predicated region
    $region14: #{tpu_custom_call.1} parent=1 // pred_check
      _
    $region15: #{tpu_custom_call.1} parent=1 // pred_check_branch
      %36 = sbr.rel (0) target = $region17
    $region16: #{tpu_custom_call.1} parent=1 // pred_region
      %s38 = ssub.s32 256, 256
      %39 = vsyncadd [#allocation3], %s38
      %s41 = sshll.u32 [#allocation2], 4
      %s42 = int_to_ptr.vmem [resolvable:$true] %s41
      %44 = dma.vmem_to_hbm [thread:$0]  %s42, 256, %s3, [#allocation3]
    $region17: #{tpu_custom_call.1} parent=1 // pred_fallthru
      _
    // Predicated region
    $region18: #{tpu_custom_call.1} parent=1 // pred_check
      _
    $region19: #{tpu_custom_call.1} parent=1 // pred_check_branch
      %46 = sbr.rel (0) target = $region21
    $region20: #{tpu_custom_call.1} parent=1 // pred_region
      %47 = dma.done [#allocation3], 256
    $region21: #{tpu_custom_call.1} parent=1 // pred_fallthru
      _
    %48 = vsyncpa [#allocation3], 1

</llo_original>
